<compile_context>
chip_gen: v7x
topology: tpu7x:2x2x1
jax: 0.10.0
libtpu: 0.0.40
codegen_flags: <defaults>
</compile_context>

<pallas_src>
import numpy as np

import jax
import jax.numpy as jnp
from jax.experimental import pallas as pl
from jax.experimental.pallas import tpu as pltpu


def attention_block_kernel(g_ref, x_ref, wgT_ref, wxT_ref, pk_ref, out_ref):
    # g_ref:   (F_l, T)      x_ref:   (F_g, T)        activations (io dtype)
    # wgT_ref: (F_int, F_l)  wxT_ref: (F_int, F_g)    folded-BN weights (io dtype)
    # pk_ref:  (F_int, 3) f32 -- col 0: bg+bx, col 1: w_psi, col 2 row 0: b_psi
    # out_ref: (F_g, T)
    g = g_ref[...]
    x = x_ref[...]

    # Two 1x1 convs (+ folded eval-mode BN) as weight-transposed matmuls:
    # (F_int, C) @ (C, T) -> (F_int, T).  f32 accumulation on the MXU.
    a = jnp.dot(wgT_ref[...], g, preferred_element_type=jnp.float32)
    a = a + jnp.dot(wxT_ref[...], x, preferred_element_type=jnp.float32)

    b_sum = pk_ref[:, 0:1]          # (F_int, 1) f32
    w_psi = pk_ref[:, 1:2]          # (F_int, 1) f32
    b_psi = pk_ref[0:1, 2:3]        # (1, 1)     f32

    a = jnp.maximum(a + b_sum, 0.0)                          # ReLU(g1 + x1)

    # psi projection (output width 1): VPU multiply + cross-sublane reduce
    # instead of a 1-column MXU matmul.
    psi_lin = jnp.sum(a * w_psi, axis=0, keepdims=True) + b_psi
    psi = jax.nn.sigmoid(psi_lin)                            # (1, T), f32

    # Gate x by psi (broadcast over channel sublanes); lane-dense store.
    out_ref[...] = (x.astype(jnp.float32) * psi).astype(out_ref.dtype)


def fold_bn(w, b, gamma, beta, mean, var, eps=1e-5):
    """Fold eval-mode BatchNorm into a 1x1 conv expressed as (Cin, Cout) matmul."""
    scale = gamma / jnp.sqrt(var + eps)       # (Cout,)
    w_f = w * scale[None, :]                  # (Cin, Cout)
    b_f = b * scale + (beta - mean * scale)   # (Cout,)
    return w_f, b_f


def _chip_vmem_bytes():
    """Per-TensorCore VMEM capacity; conservative fallback if the query fails."""
    try:
        info = pltpu.get_tpu_info()
        cap = getattr(info, "vmem_capacity_bytes", None)
        if cap:
            return int(cap)
    except Exception:
        pass
    return 64 * 1024 * 1024   # v7x floor: safe everywhere


def _pick_hw_tile(hw, n_batch, per_pixel_bytes, vmem_limit, num_cores):
    """Lane-aligned pixel tile that fits VMEM, avoids masked last tiles, and
    leaves enough grid steps for pipelining / both v7x cores."""
    budget = int(vmem_limit * 0.55)                       # headroom for weights/scratch
    t_cap = max((budget // max(per_pixel_bytes, 1)) // 128 * 128, 128)
    t_cap = min(t_cap, 4096 if num_cores == 1 else 1024)  # v7x: smaller VMEM, 2 TCs

    min_steps = 8 * num_cores

    if hw % 128 != 0:
        # Odd feature-map sizes (e.g. 14x14): the only unmasked option is the
        # full-extent tile; only fall back to a masked 128-multiple tile if the
        # full tile does not fit in VMEM.
        return hw if hw <= t_cap else t_cap

    # hw is a multiple of 128: largest 128-multiple divisor of hw within t_cap
    # -> every tile (including the last) is a full, unmasked store.
    t = 128
    for cand in range(min(t_cap, hw), 127, -128):
        if hw % cand == 0:
            t = cand
            break
    # Shrink (keeping divisibility) until there are enough grid steps.
    while (t > 128 and n_batch * (hw // t) < min_steps
           and (t // 2) % 128 == 0 and hw % (t // 2) == 0):
        t //= 2
    return t


def attention_block(g_nchw, x_nchw, params, *, hw_tile=None,
                    io_dtype=jnp.bfloat16, out_dtype=None):
    N, F_l, H, W = g_nchw.shape
    _, F_g, _, _ = x_nchw.shape
    HW = H * W
    out_dtype = io_dtype if out_dtype is None else out_dtype

    # NCHW -> (N, C, H*W): zero-copy reshape (no HBM transpose).  bf16 I/O by
    # default halves the HBM bytes for g, x and out.
    g3 = g_nchw.reshape(N, F_l, HW).astype(io_dtype)
    x3 = x_nchw.reshape(N, F_g, HW).astype(io_dtype)

    # Fold eval-mode BN into the 1x1 convs; transpose to (Cout, Cin) for the
    # pixels-on-lanes matmul orientation.
    wg, bg = fold_bn(params["wg"], params["bg"], params["g_gamma"], params["g_beta"],
                     params["g_mean"], params["g_var"])
    wx, bx = fold_bn(params["wx"], params["bx"], params["x_gamma"], params["x_beta"],
                     params["x_mean"], params["x_var"])
    wpsi, bpsi = fold_bn(params["wpsi"], params["bpsi"], params["p_gamma"],
                         params["p_beta"], params["p_mean"], params["p_var"])
    F_int = wg.shape[1]

    wgT = wg.T.astype(io_dtype)                               # (F_int, F_l)
    wxT = wx.T.astype(io_dtype)                               # (F_int, F_g)

    # Pack the three tiny parameter operands into one (F_int, 3) f32 array:
    # col 0 = bg + bx (biases pre-added), col 1 = w_psi, col 2 row 0 = b_psi.
    pk = jnp.zeros((F_int, 3), jnp.float32)
    pk = pk.at[:, 0].set((bg + bx).astype(jnp.float32))
    pk = pk.at[:, 1].set(wpsi[:, 0].astype(jnp.float32))
    pk = pk.at[0, 2].set(bpsi[0].astype(jnp.float32))

    # Generation-aware VMEM limit and tile size.
    vmem_cap = _chip_vmem_bytes()
    vmem_limit = int(vmem_cap * 0.75)                 # ~96 MiB on v5e/v6e, ~48 MiB on v7x
    num_cores = 2 if vmem_cap <= 64 * 1024 * 1024 else 1
    b_io = np.dtype(io_dtype).itemsize
    per_pixel = 2 * b_io * (F_l + 2 * F_g) + 4 * F_int    # dbl-buffered g/x/out + f32 `a`

    T = hw_tile if hw_tile is not None else _pick_hw_tile(
        HW, N, per_pixel, vmem_limit, num_cores)
    grid = (N, pl.cdiv(HW, T))   # cdiv: partial last HW tile handled by Pallas

    out3 = pl.pallas_call(
        attention_block_kernel,
        out_shape=jax.ShapeDtypeStruct((N, F_g, HW), out_dtype),
        grid_spec=pltpu.PrefetchScalarGridSpec(
            num_scalar_prefetch=0,
            grid=grid,
            in_specs=[
                pl.BlockSpec((None, F_l, T), lambda n, t: (n, 0, t)),   # g tile
                pl.BlockSpec((None, F_g, T), lambda n, t: (n, 0, t)),   # x tile
                pl.BlockSpec((F_int, F_l), lambda n, t: (0, 0)),        # Wg^T
                pl.BlockSpec((F_int, F_g), lambda n, t: (0, 0)),        # Wx^T
                pl.BlockSpec((F_int, 3), lambda n, t: (0, 0)),          # packed params
            ],
            out_specs=pl.BlockSpec((None, F_g, T), lambda n, t: (n, 0, t)),
        ),
        compiler_params=pltpu.CompilerParams(
            dimension_semantics=("parallel", "parallel"),   # megacore over (N, HW tiles)
            vmem_limit_bytes=vmem_limit,
        ),
    )(g3, x3, wgT, wxT, pk)

    # (N, F_g, H*W) -> NCHW (zero-copy reshape).
    return out3.reshape(N, F_g, H, W)


def attention_block_ref(g_nchw, x_nchw, params):
    """Pure-JAX reference (same eval-mode BN semantics), f32."""
    N, F_l, H, W = g_nchw.shape
    _, F_g, _, _ = x_nchw.shape
    M = N * H * W
    g_flat = jnp.transpose(g_nchw, (0, 2, 3, 1)).reshape(M, F_l).astype(jnp.float32)
    x_flat = jnp.transpose(x_nchw, (0, 2, 3, 1)).reshape(M, F_g).astype(jnp.float32)

    def bn(y, gamma, beta, mean, var, eps=1e-5):
        return gamma * (y - mean) / jnp.sqrt(var + eps) + beta

    g1 = bn(g_flat @ params["wg"] + params["bg"], params["g_gamma"],
            params["g_beta"], params["g_mean"], params["g_var"])
    x1 = bn(x_flat @ params["wx"] + params["bx"], params["x_gamma"],
            params["x_beta"], params["x_mean"], params["x_var"])
    a = jnp.maximum(g1 + x1, 0.0)
    p = bn(a @ params["wpsi"] + params["bpsi"], params["p_gamma"],
           params["p_beta"], params["p_mean"], params["p_var"])
    psi = jax.nn.sigmoid(p)
    out = x_flat * psi
    return jnp.transpose(out.reshape(N, H, W, F_g), (0, 3, 1, 2))


def make_params(key, F_g, F_l, F_int):
    ks = jax.random.split(key, 12)
    return {
        # 1x1 conv weights stored as (Cin, Cout) matmul matrices
        "wg": jax.random.normal(ks[0], (F_l, F_int), jnp.float32) * 0.2,
        "bg": jax.random.normal(ks[1], (F_int,), jnp.float32) * 0.1,
        "wx": jax.random.normal(ks[2], (F_g, F_int), jnp.float32) * 0.2,
        "bx": jax.random.normal(ks[3], (F_int,), jnp.float32) * 0.1,
        "wpsi": jax.random.normal(ks[4], (F_int, 1), jnp.float32) * 0.2,
        "bpsi": jax.random.normal(ks[5], (1,), jnp.float32) * 0.1,
        # BatchNorm (eval-mode) params for each BN
        "g_gamma": 1.0 + 0.1 * jax.random.normal(ks[6], (F_int,), jnp.float32),
        "g_beta": 0.1 * jax.random.normal(ks[7], (F_int,), jnp.float32),
        "g_mean": 0.05 * jax.random.normal(ks[8], (F_int,), jnp.float32),
        "g_var": jnp.abs(1.0 + 0.1 * jax.random.normal(ks[9], (F_int,), jnp.float32)),
        "x_gamma": 1.0 + 0.1 * jax.random.normal(ks[10], (F_int,), jnp.float32),
        "x_beta": 0.1 * jax.random.normal(ks[11], (F_int,), jnp.float32),
        "x_mean": jnp.zeros((F_int,), jnp.float32),
        "x_var": jnp.ones((F_int,), jnp.float32),
        "p_gamma": jnp.ones((1,), jnp.float32) * 1.1,
        "p_beta": jnp.ones((1,), jnp.float32) * 0.05,
        "p_mean": jnp.zeros((1,), jnp.float32),
        "p_var": jnp.ones((1,), jnp.float32),
    }


if __name__ == "__main__":
    key = jax.random.PRNGKey(0)
    k_g, k_x, k_p = jax.random.split(key, 3)

    N, F_g, F_l, F_int, H, W = 2, 4, 4, 8, 16, 16
    # forward(g, x): W_g_conv expects F_l channels on g, W_x_conv expects F_g on x
    g = jax.random.normal(k_g, (N, F_l, H, W), jnp.float32)
    x = jax.random.normal(k_x, (N, F_g, H, W), jnp.float32)
    params = make_params(k_p, F_g, F_l, F_int)

    ref = attention_block_ref(g, x, params)

    # Default path: bf16 HBM I/O (halves DMA bytes), f32 accumulation/psi/gating.
    out_bf16 = jax.block_until_ready(attention_block(g, x, params))
    assert out_bf16.shape == (N, F_g, H, W)
    assert out_bf16.dtype == jnp.bfloat16
    assert jnp.allclose(out_bf16.astype(jnp.float32), ref, atol=5e-2, rtol=5e-2), \
        "bf16 (default) mismatch vs reference"

    # Exact path: f32 I/O, tight tolerance vs the pure-JAX reference.
    out_f32 = jax.block_until_ready(attention_block(g, x, params, io_dtype=jnp.float32))
    assert out_f32.shape == (N, F_g, H, W)
    assert out_f32.dtype == jnp.float32
    assert jnp.allclose(out_f32, ref, atol=1e-4, rtol=1e-4), "f32 mismatch vs reference"

    print("KERNEL_OK")
</pallas_src>

<mosaic_0001>
module attributes {stable_mosaic.version = 11 : i64} {
  func.func @attention_block_kernel(%arg0: i32, %arg1: i32, %arg2: memref<1x4x128xbf16, #tpu.memory_space<vmem>>, %arg3: memref<1x4x128xbf16, #tpu.memory_space<vmem>>, %arg4: memref<8x4xbf16, #tpu.memory_space<vmem>>, %arg5: memref<8x4xbf16, #tpu.memory_space<vmem>>, %arg6: memref<8x3xf32, #tpu.memory_space<vmem>>, %arg7: memref<1x4x128xbf16, #tpu.memory_space<vmem>>) attributes {dimension_semantics = [#tpu.dimension_semantics<parallel>, #tpu.dimension_semantics<parallel>], iteration_bounds = array<i64: 2, 2>, scalar_prefetch = 0 : i64, scratch_operands = 0 : i64, tpu.core_type = #tpu.core_type<tc>, window_params = [{transform_indices = @transform_0, window_bounds = array<i64: 1, 4, 128>}, {transform_indices = @transform_1, window_bounds = array<i64: 1, 4, 128>}, {pipeline_mode = #tpu.pipeline_mode<synchronous>, transform_indices = @transform_2, window_bounds = array<i64: 8, 4>}, {pipeline_mode = #tpu.pipeline_mode<synchronous>, transform_indices = @transform_3, window_bounds = array<i64: 8, 4>}, {pipeline_mode = #tpu.pipeline_mode<synchronous>, transform_indices = @transform_4, window_bounds = array<i64: 8, 3>}, {transform_indices = @transform_5, window_bounds = array<i64: 1, 4, 128>}]} {
    %c0 = arith.constant 0 : index
    %c0_0 = arith.constant 0 : index
    %c0_1 = arith.constant 0 : index
    %0 = vector.load %arg2[%c0, %c0_0, %c0_1] : memref<1x4x128xbf16, #tpu.memory_space<vmem>>, vector<1x4x128xbf16>
    %1 = vector.shape_cast %0 : vector<1x4x128xbf16> to vector<4x128xbf16>
    %c0_2 = arith.constant 0 : index
    %c0_3 = arith.constant 0 : index
    %c0_4 = arith.constant 0 : index
    %2 = vector.load %arg3[%c0_2, %c0_3, %c0_4] : memref<1x4x128xbf16, #tpu.memory_space<vmem>>, vector<1x4x128xbf16>
    %3 = vector.shape_cast %2 : vector<1x4x128xbf16> to vector<4x128xbf16>
    %c0_5 = arith.constant 0 : index
    %c0_6 = arith.constant 0 : index
    %4 = vector.load %arg4[%c0_5, %c0_6] : memref<8x4xbf16, #tpu.memory_space<vmem>>, vector<8x4xbf16>
    %cst = arith.constant dense<0.000000e+00> : vector<8x128xf32>
    %5 = tpu.matmul %4, %1, %cst {dimension_numbers = #tpu.dot_dimension_numbers<[1], [0], [0], [1], [0, 0, 1, 1], [], []>} : vector<8x4xbf16>, vector<4x128xbf16>, vector<8x128xf32> -> vector<8x128xf32>
    %c0_7 = arith.constant 0 : index
    %c0_8 = arith.constant 0 : index
    %6 = vector.load %arg5[%c0_7, %c0_8] : memref<8x4xbf16, #tpu.memory_space<vmem>>, vector<8x4xbf16>
    %cst_9 = arith.constant dense<0.000000e+00> : vector<8x128xf32>
    %7 = tpu.matmul %6, %3, %cst_9 {dimension_numbers = #tpu.dot_dimension_numbers<[1], [0], [0], [1], [0, 0, 1, 1], [], []>} : vector<8x4xbf16>, vector<4x128xbf16>, vector<8x128xf32> -> vector<8x128xf32>
    %8 = arith.addf %5, %7 : vector<8x128xf32>
    %c0_10 = arith.constant 0 : index
    %c0_11 = arith.constant 0 : index
    %9 = vector.load %arg6[%c0_10, %c0_11] : memref<8x3xf32, #tpu.memory_space<vmem>>, vector<8x1xf32>
    %c0_12 = arith.constant 0 : index
    %c1 = arith.constant 1 : index
    %10 = vector.load %arg6[%c0_12, %c1] : memref<8x3xf32, #tpu.memory_space<vmem>>, vector<8x1xf32>
    %c0_13 = arith.constant 0 : index
    %c2 = arith.constant 2 : index
    %11 = vector.load %arg6[%c0_13, %c2] : memref<8x3xf32, #tpu.memory_space<vmem>>, vector<1x1xf32>
    %12 = vector.broadcast %9 : vector<8x1xf32> to vector<8x128xf32>
    %13 = arith.addf %8, %12 : vector<8x128xf32>
    %cst_14 = arith.constant 0.000000e+00 : f32
    %14 = vector.broadcast %cst_14 : f32 to vector<8x128xf32>
    %15 = arith.maximumf %13, %14 : vector<8x128xf32>
    %16 = vector.broadcast %10 : vector<8x1xf32> to vector<8x128xf32>
    %17 = arith.mulf %15, %16 : vector<8x128xf32>
    %cst_15 = arith.constant dense<0.000000e+00> : vector<128xf32>
    %18 = vector.multi_reduction <add>, %17, %cst_15 [0] : vector<8x128xf32> to vector<128xf32>
    %19 = vector.shape_cast %18 : vector<128xf32> to vector<1x128xf32>
    %20 = vector.broadcast %11 : vector<1x1xf32> to vector<1x128xf32>
    %21 = arith.addf %19, %20 : vector<1x128xf32>
    %22 = arith.negf %21 : vector<1x128xf32>
    %23 = math.exp %22 : vector<1x128xf32>
    %cst_16 = arith.constant 1.000000e+00 : f32
    %24 = vector.broadcast %cst_16 : f32 to vector<1x128xf32>
    %25 = arith.addf %24, %23 : vector<1x128xf32>
    %26 = arith.divf %24, %25 : vector<1x128xf32>
    %27 = arith.extf %3 : vector<4x128xbf16> to vector<4x128xf32>
    %28 = vector.broadcast %26 : vector<1x128xf32> to vector<4x128xf32>
    %29 = arith.mulf %27, %28 : vector<4x128xf32>
    %30 = arith.truncf %29 : vector<4x128xf32> to vector<4x128xbf16>
    %c0_17 = arith.constant 0 : index
    %c0_18 = arith.constant 0 : index
    %c0_19 = arith.constant 0 : index
    %31 = vector.load %arg7[%c0_17, %c0_18, %c0_19] : memref<1x4x128xbf16, #tpu.memory_space<vmem>>, vector<1x4x128xbf16>
    %32 = vector.shape_cast %31 : vector<1x4x128xbf16> to vector<4x128xbf16>
    %33 = vector.shape_cast %30 : vector<4x128xbf16> to vector<1x4x128xbf16>
    tpu.vector_store %arg7[%c0_17, %c0_18, %c0_19], %33 {strides = array<i32>} : memref<1x4x128xbf16, #tpu.memory_space<vmem>>, vector<1x4x128xbf16>,
    return
  }
  func.func @transform_0(%arg0: i32, %arg1: i32) -> (i32, i32, i32) {
    %c0_i32 = arith.constant 0 : i32
    %c0_i32_0 = arith.constant 0 : i32
    return %arg0, %c0_i32, %arg1 : i32, i32, i32
  }
  func.func @transform_1(%arg0: i32, %arg1: i32) -> (i32, i32, i32) {
    %c0_i32 = arith.constant 0 : i32
    %c0_i32_0 = arith.constant 0 : i32
    return %arg0, %c0_i32, %arg1 : i32, i32, i32
  }
  func.func @transform_2(%arg0: i32, %arg1: i32) -> (i32, i32) {
    %c0_i32 = arith.constant 0 : i32
    %c0_i32_0 = arith.constant 0 : i32
    %c0_i32_1 = arith.constant 0 : i32
    return %c0_i32, %c0_i32_0 : i32, i32
  }
  func.func @transform_3(%arg0: i32, %arg1: i32) -> (i32, i32) {
    %c0_i32 = arith.constant 0 : i32
    %c0_i32_0 = arith.constant 0 : i32
    %c0_i32_1 = arith.constant 0 : i32
    return %c0_i32, %c0_i32_0 : i32, i32
  }
  func.func @transform_4(%arg0: i32, %arg1: i32) -> (i32, i32) {
    %c0_i32 = arith.constant 0 : i32
    %c0_i32_0 = arith.constant 0 : i32
    %c0_i32_1 = arith.constant 0 : i32
    return %c0_i32, %c0_i32_0 : i32, i32
  }
  func.func @transform_5(%arg0: i32, %arg1: i32) -> (i32, i32, i32) {
    %c0_i32 = arith.constant 0 : i32
    %c0_i32_0 = arith.constant 0 : i32
    return %arg0, %c0_i32, %arg1 : i32, i32, i32
  }
}

</mosaic_0001>

<llo_original>
// kernel: tpu_custom_call.1
$region0: #{tpu_custom_call.1}
  #allocation0 [shape = 'u32[]', space=smem, size = 0x4, offset = 0x4, fixed_abs, tag = 'smem constant byte address 0x4 - core index']
  #allocation1 [shape = 'u32[144,128]{1,0:T(1,128)}', space=vmem, size = 0x12000, scoped, tag = 'internal scratch']
  %s0 = inlined_call_operand.vmem [shape: bf16[2,4,256], index: 0, kind: input, shape index: {}]
  %s1 = inlined_call_operand.vmem [shape: bf16[2,4,256], index: 1, kind: input, shape index: {}]
  %s2 = inlined_call_operand.vmem [shape: bf16[8,4], index: 2, kind: input, shape index: {}]
  %s3 = inlined_call_operand.vmem [shape: bf16[8,4], index: 3, kind: input, shape index: {}]
  %s4 = inlined_call_operand.vmem [shape: f32[8,3], index: 4, kind: input, shape index: {}]
  %s5 = inlined_call_operand.hbm [shape: bf16[2,4,256], index: 5, kind: output, shape index: {}]
  %s6 = sld [smem:[#allocation0]]
  $region53: #{tpu_custom_call.1} parent=0
    _
  %s8 = ssub.s32 1, %s6
  %s9 = scalar_select 0, %s8, %s6
  $region1: #{tpu_custom_call.1} parent=0
    #allocation2 [shape = 'u8[2048]{0}', space=vmem, size = 0x800, scoped, tag = 'output window, operand 0']
    #allocation3 [shape = 's32[2]{0}', space=sflag, size = 0x8, scoped, tag = 'scoped memory for tpu_custom_call.1']
    %10 = vsyncpa [#allocation3], 0
    %s11 = scalar_lea.sflag [#allocation3], 1
    %12 = vsyncpa %s11, 0
    loop: start=0, step=1, limit=6
    $region2: #{tpu_custom_call.1} parent=1 // loop_pre_header
      _
    $region3: #{tpu_custom_call.1} parent=1 // loop_header
      %s14 = sphi 0, %s18
      %p15 = scmp.ge.s32.totalorder %s14, 6
      %s21 = sphi 0, %s33
      %s22 = sphi 0, %s29
      %s23 = sphi 0, %s21
      %s24 = sphi 0, %s22
      %s25 = sphi 0, %s23
      %s26 = sphi 0, %s24
      %s38 = sphi 0, %s40
      %s41 = sphi 0, %s38
      %s42 = sphi 0, %s41
      %s58 = sphi 0, %s42
      %s66 = sphi 0, %s68
      %s69 = sphi 0, %s66
      %s70 = sphi 0, %s69
      %s86 = sphi 0, %s70
      %s90 = sphi 0, %s90
      %s92 = sphi 0, %s90
      %s93 = sphi 0, %s92
      %s107 = sphi 0, %s93
      %s111 = sphi 0, %s111
      %s113 = sphi 0, %s111
      %s114 = sphi 0, %s113
      %s128 = sphi 0, %s114
      %s132 = sphi 0, %s132
      %s134 = sphi 0, %s132
      %s135 = sphi 0, %s134
      %s149 = sphi 0, %s135
      %s157 = sphi 0, %s159
      %s160 = sphi 0, %s157
      %s161 = sphi 0, %s160
      %s177 = sphi 0, %s161
    $region4: #{tpu_custom_call.1} parent=1 // loop_header_branch
      %17 = sbr.rel (%p15) target = $region8
    $region5: #{tpu_custom_call.1} parent=1 // loop_body
      %s19 = ssub.s32 %s14, 1
      %s20 = ssub.s32 %s14, 2
      %s27 = sadd.s32 1, %s22
      %p28 = scmp.ge.s32.totalorder %s27, 2
      %s29 = scalar_select %p28, 0, %s27
      %s30 = sadd.s32 1, %s21
      %s31 = scalar_select %p28, %s30, %s21
      %p32 = scmp.ge.s32.totalorder %s31, 2
      %s33 = scalar_select %p32, 0, %s31
      %s34 = ssub.s32 %s21, %s33
      %s35 = ssub.s32 %s22, %s29
      %s36 = sor.u32 %s34, %s35
      %p37 = scmp.eq.s32.totalorder %s36, 0
      %s39 = sadd.s32 %s38, 1
      %s40 = scalar_select %p37, %s38, %s39
      %p43 = pneg %p37
      %p44 = scmp.eq.s32.totalorder %s14, 3
      %p45 = por %p43, %p44
      %p46 = scmp.ne.s32.totalorder %s38, %s41
      %p47 = scmp.eq.s32.totalorder %s14, 0
      %p48 = por %p46, %p47
      %p49 = scmp.ne.s32.totalorder %s38, %s41
      %p50 = scmp.eq.s32.totalorder %s19, 3
      %p51 = por %p49, %p50
      %p52 = scmp.ne.s32.totalorder %s41, %s42
      %p53 = scmp.eq.s32.totalorder %s19, 0
      %p54 = por %p52, %p53
      %p55 = scmp.ne.s32.totalorder %s41, %s42
      %p56 = scmp.eq.s32.totalorder %s20, 3
      %p57 = por %p55, %p56
      %p59 = scmp.ne.s32.totalorder %s42, %s58
      %p60 = scmp.eq.s32.totalorder %s20, 0
      %p61 = por %p59, %p60
      %s62 = ssub.s32 %s21, %s33
      %s63 = ssub.s32 %s22, %s29
      %s64 = sor.u32 %s62, %s63
      %p65 = scmp.eq.s32.totalorder %s64, 0
      %s67 = sadd.s32 %s66, 1
      %s68 = scalar_select %p65, %s66, %s67
      %p71 = pneg %p65
      %p72 = scmp.eq.s32.totalorder %s14, 3
      %p73 = por %p71, %p72
      %p74 = scmp.ne.s32.totalorder %s66, %s69
      %p75 = scmp.eq.s32.totalorder %s14, 0
      %p76 = por %p74, %p75
      %p77 = scmp.ne.s32.totalorder %s66, %s69
      %p78 = scmp.eq.s32.totalorder %s19, 3
      %p79 = por %p77, %p78
      %p80 = scmp.ne.s32.totalorder %s69, %s70
      %p81 = scmp.eq.s32.totalorder %s19, 0
      %p82 = por %p80, %p81
      %p83 = scmp.ne.s32.totalorder %s69, %s70
      %p84 = scmp.eq.s32.totalorder %s20, 3
      %p85 = por %p83, %p84
      %p87 = scmp.ne.s32.totalorder %s70, %s86
      %p88 = scmp.eq.s32.totalorder %s20, 0
      %p89 = por %p87, %p88
      %s91 = sadd.s32 %s90, 1
      %p94 = scmp.eq.s32.totalorder %s14, 3
      %p95 = scmp.ne.s32.totalorder %s90, %s92
      %p96 = scmp.eq.s32.totalorder %s14, 0
      %p97 = por %p95, %p96
      %p98 = scmp.ne.s32.totalorder %s90, %s92
      %p99 = scmp.eq.s32.totalorder %s19, 3
      %p100 = por %p98, %p99
      %p101 = scmp.ne.s32.totalorder %s92, %s93
      %p102 = scmp.eq.s32.totalorder %s19, 0
      %p103 = por %p101, %p102
      %p104 = scmp.ne.s32.totalorder %s92, %s93
      %p105 = scmp.eq.s32.totalorder %s20, 3
      %p106 = por %p104, %p105
      %p108 = scmp.ne.s32.totalorder %s93, %s107
      %p109 = scmp.eq.s32.totalorder %s20, 0
      %p110 = por %p108, %p109
      %s112 = sadd.s32 %s111, 1
      %p115 = scmp.eq.s32.totalorder %s14, 3
      %p116 = scmp.ne.s32.totalorder %s111, %s113
      %p117 = scmp.eq.s32.totalorder %s14, 0
      %p118 = por %p116, %p117
      %p119 = scmp.ne.s32.totalorder %s111, %s113
      %p120 = scmp.eq.s32.totalorder %s19, 3
      %p121 = por %p119, %p120
      %p122 = scmp.ne.s32.totalorder %s113, %s114
      %p123 = scmp.eq.s32.totalorder %s19, 0
      %p124 = por %p122, %p123
      %p125 = scmp.ne.s32.totalorder %s113, %s114
      %p126 = scmp.eq.s32.totalorder %s20, 3
      %p127 = por %p125, %p126
      %p129 = scmp.ne.s32.totalorder %s114, %s128
      %p130 = scmp.eq.s32.totalorder %s20, 0
      %p131 = por %p129, %p130
      %s133 = sadd.s32 %s132, 1
      %p136 = scmp.eq.s32.totalorder %s14, 3
      %p137 = scmp.ne.s32.totalorder %s132, %s134
      %p138 = scmp.eq.s32.totalorder %s14, 0
      %p139 = por %p137, %p138
      %p140 = scmp.ne.s32.totalorder %s132, %s134
      %p141 = scmp.eq.s32.totalorder %s19, 3
      %p142 = por %p140, %p141
      %p143 = scmp.ne.s32.totalorder %s134, %s135
      %p144 = scmp.eq.s32.totalorder %s19, 0
      %p145 = por %p143, %p144
      %p146 = scmp.ne.s32.totalorder %s134, %s135
      %p147 = scmp.eq.s32.totalorder %s20, 3
      %p148 = por %p146, %p147
      %p150 = scmp.ne.s32.totalorder %s135, %s149
      %p151 = scmp.eq.s32.totalorder %s20, 0
      %p152 = por %p150, %p151
      %s153 = ssub.s32 %s21, %s33
      %s154 = ssub.s32 %s22, %s29
      %s155 = sor.u32 %s153, %s154
      %p156 = scmp.eq.s32.totalorder %s155, 0
      %s158 = sadd.s32 %s157, 1
      %s159 = scalar_select %p156, %s157, %s158
      %p162 = pneg %p156
      %p163 = scmp.eq.s32.totalorder %s14, 3
      %p164 = por %p162, %p163
      %p165 = scmp.ne.s32.totalorder %s157, %s160
      %p166 = scmp.eq.s32.totalorder %s14, 0
      %p167 = por %p165, %p166
      %p168 = scmp.ne.s32.totalorder %s157, %s160
      %p169 = scmp.eq.s32.totalorder %s19, 3
      %p170 = por %p168, %p169
      %p171 = scmp.ne.s32.totalorder %s160, %s161
      %p172 = scmp.eq.s32.totalorder %s19, 0
      %p173 = por %p171, %p172
      %p174 = scmp.ne.s32.totalorder %s160, %s161
      %p175 = scmp.eq.s32.totalorder %s20, 3
      %p176 = por %p174, %p175
      %p178 = scmp.ne.s32.totalorder %s161, %s177
      %p179 = scmp.eq.s32.totalorder %s20, 0
      %p180 = por %p178, %p179
      %p181 = scmp.le.s32.totalorder 1, %s14
      %p182 = scmp.lt.s32.totalorder %s14, 5
      %p183 = pnand %p181, %p182
      %p184 = pneg %p183
      // Predicated region
      $region9: #{tpu_custom_call.1} parent=5 // pred_check
        _
      $region10: #{tpu_custom_call.1} parent=5 // pred_check_branch
        %186 = sbr.rel (%p183) target = $region12
      $region11: #{tpu_custom_call.1} parent=5 // pred_region
        %s187 = ssub.s32 %s14, 1
        // Predicated region
        $region13: #{tpu_custom_call.1} parent=11 // pred_check
          %p188 = pneg %p103
        $region14: #{tpu_custom_call.1} parent=11 // pred_check_branch
          %190 = sbr.rel (%p188) target = $region16
        $region15: #{tpu_custom_call.1} parent=11 // pred_region
          _
        $region16: #{tpu_custom_call.1} parent=11 // pred_fallthru
          _
        // Predicated region
        $region17: #{tpu_custom_call.1} parent=11 // pred_check
          %p191 = pneg %p124
        $region18: #{tpu_custom_call.1} parent=11 // pred_check_branch
          %193 = sbr.rel (%p191) target = $region20
        $region19: #{tpu_custom_call.1} parent=11 // pred_region
          _
        $region20: #{tpu_custom_call.1} parent=11 // pred_fallthru
          _
        // Predicated region
        $region21: #{tpu_custom_call.1} parent=11 // pred_check
          %p194 = pneg %p145
        $region22: #{tpu_custom_call.1} parent=11 // pred_check_branch
          %196 = sbr.rel (%p194) target = $region24
        $region23: #{tpu_custom_call.1} parent=11 // pred_region
          _
        $region24: #{tpu_custom_call.1} parent=11 // pred_fallthru
          _
      $region12: #{tpu_custom_call.1} parent=5 // pred_fallthru
        _
      %p197 = scmp.lt.s32.totalorder %s14, 4
      // Predicated region
      $region25: #{tpu_custom_call.1} parent=5 // pred_check
        %p198 = pneg %p197
      $region26: #{tpu_custom_call.1} parent=5 // pred_check_branch
        %200 = sbr.rel (%p198) target = $region28
      $region27: #{tpu_custom_call.1} parent=5 // pred_region
        // Predicated region
        $region29: #{tpu_custom_call.1} parent=27 // pred_check
          %p201 = pneg %p48
        $region30: #{tpu_custom_call.1} parent=27 // pred_check_branch
          %203 = sbr.rel (%p201) target = $region32
        $region31: #{tpu_custom_call.1} parent=27 // pred_region
          %p204 = scmp.lt.s32.totalorder %s21, 1
          %s205 = scalar_select %p204, %s21, 1
          %p206 = scmp.lt.s32.totalorder %s22, 1
          %s207 = scalar_select %p206, %s22, 1
          %s208 = smul.addr %s205, 2
          %s209 = sadd.s32 %s207, %s208
          %s210 = smul.addr %s209, 2
          %s211 = scalar_lea.vmem %s0, %s210
        $region32: #{tpu_custom_call.1} parent=27 // pred_fallthru
          _
        // Predicated region
        $region33: #{tpu_custom_call.1} parent=27 // pred_check
          %p212 = pneg %p76
        $region34: #{tpu_custom_call.1} parent=27 // pred_check_branch
          %214 = sbr.rel (%p212) target = $region36
        $region35: #{tpu_custom_call.1} parent=27 // pred_region
          %p215 = scmp.lt.s32.totalorder %s21, 1
          %s216 = scalar_select %p215, %s21, 1
          %p217 = scmp.lt.s32.totalorder %s22, 1
          %s218 = scalar_select %p217, %s22, 1
          %s219 = smul.addr %s216, 2
          %s220 = sadd.s32 %s218, %s219
          %s221 = smul.addr %s220, 2
          %s222 = scalar_lea.vmem %s1, %s221
        $region36: #{tpu_custom_call.1} parent=27 // pred_fallthru
          _
      $region28: #{tpu_custom_call.1} parent=5 // pred_fallthru
        _
      %p223 = scmp.le.s32.totalorder 1, %s14
      %p224 = scmp.lt.s32.totalorder %s14, 5
      %p225 = pnand %p223, %p224
      %p226 = pneg %p225
      // Predicated region
      $region37: #{tpu_custom_call.1} parent=5 // pred_check
        _
      $region38: #{tpu_custom_call.1} parent=5 // pred_check_branch
        %228 = sbr.rel (%p225) target = $region40
      $region39: #{tpu_custom_call.1} parent=5 // pred_region
        %s229 = ssub.s32 %s14, 1
        %p230 = scmp.lt.s32.totalorder %s23, 1
        %s231 = scalar_select %p230, %s23, 1
        %p232 = scmp.lt.s32.totalorder %s24, 1
        %s233 = scalar_select %p232, %s24, 1
        %s234 = smul.addr %s231, 2
        %s235 = sadd.s32 %s233, %s234
        %s236 = smul.addr %s235, 2
        %s237 = scalar_lea.vmem %s0, %s236
        %p238 = pneg %p54
        %p239 = pneg %p51
        %p240 = scmp.lt.s32.totalorder %s23, 1
        %s241 = scalar_select %p240, %s23, 1
        %p242 = scmp.lt.s32.totalorder %s24, 1
        %s243 = scalar_select %p242, %s24, 1
        %s244 = smul.addr %s241, 2
        %s245 = sadd.s32 %s243, %s244
        %s246 = smul.addr %s245, 2
        %s247 = scalar_lea.vmem %s1, %s246
        %p248 = pneg %p82
        %p249 = pneg %p79
        %p250 = pneg %p103
        %p251 = pneg %p100
        %p252 = pneg %p124
        %p253 = pneg %p121
        %p254 = pneg %p145
        %p255 = pneg %p142
        %p256 = pneg %p173
        %p257 = pneg %p170
        %s258 = sand.u32 %s160, 1
        %s259 = scalar_lea.sflag [#allocation3], %s258
        %s260 = sand.u32 %s160, 1
        %s261 = smul.addr %s260, 2
        %s262 = scalar_lea.vmem [#allocation2], %s261
        %p263 = scmp.lt.s32.totalorder %s23, 1
        %s264 = scalar_select %p263, %s23, 1
        %p265 = scmp.lt.s32.totalorder %s24, 1
        %s266 = scalar_select %p265, %s24, 1
        %s267 = smul.addr %s264, 2
        %s268 = sadd.s32 %s266, %s267
        %s269 = smul.addr %s268, 2
        %s270 = scalar_lea.vmem %s0, %s269
        %p271 = scmp.lt.s32.totalorder %s23, 1
        %s272 = scalar_select %p271, %s23, 1
        %p273 = scmp.lt.s32.totalorder %s24, 1
        %s274 = scalar_select %p273, %s24, 1
        %s275 = smul.addr %s272, 2
        %s276 = sadd.s32 %s274, %s275
        %s277 = smul.addr %s276, 2
        %s278 = scalar_lea.vmem %s1, %s277
        %v280 = vld [vmem:[%s270] sm:$0x3]
        %v281 = vld [vmem:[%s278] sm:$0x3]
        %v282 = vld [vmem:[%s2] sm:$0xf]
        %v283 = vld [vmem:[%s3] sm:$0xf]
        %vm284 = vcmask 31744
        %v286 = vsel %vm284, %v283, 0
        %vm288 = vcmask 1041408
        %v290 = vsel %vm288, %v281, 0
        %292 = vmatprep.subr.bf16.mxu0 0
        %293 = vmatpush1.bf16.msra.mxu0 %v290
        %294 = vmatprep.subr.bf16.mxu0 0
        %295 = vmatpush1.bf16.msra.mxu0 0
        %296 = vmatprep.subr.bf16.mxu0 0
        %297 = vmatpush1.bf16.msra.mxu0 0
        %298 = vmatprep.subr.bf16.mxu0 0
        %299 = vmatpush1.bf16.msra.mxu0 0
        %300 = vmatprep.subr.bf16.mxu0 0
        %301 = vmatpush1.bf16.msra.mxu0 0
        %302 = vmatprep.subr.bf16.mxu0 0
        %303 = vmatpush1.bf16.msra.mxu0 0
        %304 = vmatprep.subr.bf16.mxu0 0
        %305 = vmatpush1.bf16.msra.mxu0 0
        %306 = vmatprep.subr.bf16.mxu0 0
        %307 = vmatpush1.bf16.msra.mxu0 0
        %308 = vmatprep.subr.bf16.mxu0 0
        %309 = vmatpush1.bf16.msra.mxu0 0
        %310 = vmatprep.subr.bf16.mxu0 0
        %311 = vmatpush1.bf16.msra.mxu0 0
        %312 = vmatprep.subr.bf16.mxu0 0
        %313 = vmatpush1.bf16.msra.mxu0 0
        %314 = vmatprep.subr.bf16.mxu0 0
        %315 = vmatpush1.bf16.msra.mxu0 0
        %316 = vmatprep.subr.bf16.mxu0 0
        %317 = vmatpush1.bf16.msra.mxu0 0
        %318 = vmatprep.subr.bf16.mxu0 0
        %319 = vmatpush1.bf16.msra.mxu0 0
        %320 = vmatprep.subr.bf16.mxu0 0
        %321 = vmatpush1.bf16.msra.mxu0 0
        %322 = vmatprep.subr.bf16.mxu0 0
        %323 = vmatpush1.bf16.msra.mxu0 0
        %324 = vmatprep.mubr.bf16.mxu0 0
        %325 = vmatmul.mubr.bf16.gmra.mrb[0].mxu0 %v286
        %v326 = vpop.f32.mrb[0].mxu0
        %v327 = vadd.f32 0.0, %v326
        %v328 = vpop.f32.mrb[0].mxu0
        %v329 = vpop.f32.mrb[0].mxu0
        %v330 = vpop.f32.mrb[0].mxu0
        %331 = vdwg.mxu0
        %v333 = vsel %vm284, %v282, 0
        %v336 = vsel %vm288, %v280, 0
        %338 = vmatprep.subr.bf16.mxu0 0
        %339 = vmatpush1.bf16.msra.mxu0 %v336
        %340 = vmatprep.subr.bf16.mxu0 0
        %341 = vmatpush1.bf16.msra.mxu0 0
        %342 = vmatprep.subr.bf16.mxu0 0
        %343 = vmatpush1.bf16.msra.mxu0 0
        %344 = vmatprep.subr.bf16.mxu0 0
        %345 = vmatpush1.bf16.msra.mxu0 0
        %346 = vmatprep.subr.bf16.mxu0 0
        %347 = vmatpush1.bf16.msra.mxu0 0
        %348 = vmatprep.subr.bf16.mxu0 0
        %349 = vmatpush1.bf16.msra.mxu0 0
        %350 = vmatprep.subr.bf16.mxu0 0
        %351 = vmatpush1.bf16.msra.mxu0 0
        %352 = vmatprep.subr.bf16.mxu0 0
        %353 = vmatpush1.bf16.msra.mxu0 0
        %354 = vmatprep.subr.bf16.mxu0 0
        %355 = vmatpush1.bf16.msra.mxu0 0
        %356 = vmatprep.subr.bf16.mxu0 0
        %357 = vmatpush1.bf16.msra.mxu0 0
        %358 = vmatprep.subr.bf16.mxu0 0
        %359 = vmatpush1.bf16.msra.mxu0 0
        %360 = vmatprep.subr.bf16.mxu0 0
        %361 = vmatpush1.bf16.msra.mxu0 0
        %362 = vmatprep.subr.bf16.mxu0 0
        %363 = vmatpush1.bf16.msra.mxu0 0
        %364 = vmatprep.subr.bf16.mxu0 0
        %365 = vmatpush1.bf16.msra.mxu0 0
        %366 = vmatprep.subr.bf16.mxu0 0
        %367 = vmatpush1.bf16.msra.mxu0 0
        %368 = vmatprep.subr.bf16.mxu0 0
        %369 = vmatpush1.bf16.msra.mxu0 0
        %370 = vmatprep.mubr.bf16.mxu0 0
        %371 = vmatmul.mubr.bf16.gmra.mrb[0].mxu0 %v333
        %v372 = vpop.f32.mrb[0].mxu0
        %v373 = vadd.f32 %v327, %v372
        %v374 = vpop.f32.mrb[0].mxu0
        %v375 = vpop.f32.mrb[0].mxu0
        %v376 = vpop.f32.mrb[0].mxu0
        %377 = vdwg.mxu0
        %v378 = vld [vmem:[%s4] sm:$0xff]
        %v379 = vld [vmem:[%s4] sm:$0x1]
        %381 = vset.pattern.permute.xlu0 0
        %382 = vperm.xlu0 %381, %v378
        %v383 = vpop.permute.xlu0 %382
        %v385 = vadd.f32 %v373, %v383
        %v386 = vmax.f32 %v385, 0.0
        %387 = vset.pattern.permute.xlu0 1
        %388 = vperm.xlu0 %387, %v378
        %v389 = vpop.permute.xlu0 %388
        %v391 = vmul.f32 %v386, %v389
        %v392 = vrot.slane %v391, 4
        %v393 = vadd.f32 %v391, %v392
        %v394 = vrot.slane %v393, 2
        %v395 = vadd.f32 %v393, %v394
        %v396 = vrot.slane %v395, 1
        %v397 = vadd.f32 %v395, %v396
        %399 = vset.pattern.permute.xlu0 2
        %400 = vperm.xlu0 %399, %v379
        %v401 = vpop.permute.xlu0 %400
        %v403 = vadd.f32 %v397, %v401
        %v404 = vxor.u32 %v403, 2147483648
        %v405 = vmul.f32 %v404, 1.442695
        %v406 = vpow.pop %v405
        %v407 = vadd.f32 %v406, 1.0
        %v408 = vrcp.pop %v407
        %v409 = vmul.f32 1.0, %v408
        %v410 = vunpack.c.l.bf16 %v281
        %v411 = vlaneseq
        %v412 = vshrl.u32 %v411, 7
        %v413 = vsub.s32 0, %v412
        %v414 = vrot.slane %v409, %v413
        %v415 = vmul.f32 %v410, %v414
        %v416 = vpack.c.bf16 %v415, %v415
        %417 = vst [vmem:[%s262] sm:$0x3] %v416
        %s418 = sand.u32 %s160, 1
        %s419 = scalar_lea.sflag [#allocation3], %s418
        %s420 = sand.u32 %s160, 1
        %s421 = smul.addr %s420, 2
        %s422 = scalar_lea.vmem [#allocation2], %s421
        // Predicated region
        $region41: #{tpu_custom_call.1} parent=39 // pred_check
          %p423 = pneg %p170
        $region42: #{tpu_custom_call.1} parent=39 // pred_check_branch
          %425 = sbr.rel (%p423) target = $region44
        $region43: #{tpu_custom_call.1} parent=39 // pred_region
          %s427 = ssub.s32 32, 32
          %428 = vsyncadd %s419, %s427
          %s429 = smul.addr %s23, 2
          %s430 = sadd.s32 %s24, %s429
          %s431 = smul.addr %s430, 32
          %s432 = scalar_lea.hbm %s5, %s431
          %s434 = sshll.u32 %s422, 4
          %s435 = int_to_ptr.vmem [resolvable:$true] %s434
          %437 = dma.vmem_to_hbm [thread:$0]  %s435, 32, %s432, %s419
        $region44: #{tpu_custom_call.1} parent=39 // pred_fallthru
          _
      $region40: #{tpu_custom_call.1} parent=5 // pred_fallthru
        _
      %p438 = scmp.le.s32.totalorder 2, %s14
      // Predicated region
      $region45: #{tpu_custom_call.1} parent=5 // pred_check
        %p439 = pneg %p438
      $region46: #{tpu_custom_call.1} parent=5 // pred_check_branch
        %441 = sbr.rel (%p439) target = $region48
      $region47: #{tpu_custom_call.1} parent=5 // pred_region
        %s442 = ssub.s32 %s14, 2
        // Predicated region
        $region49: #{tpu_custom_call.1} parent=47 // pred_check
          %p443 = pneg %p176
        $region50: #{tpu_custom_call.1} parent=47 // pred_check_branch
          %445 = sbr.rel (%p443) target = $region52
        $region51: #{tpu_custom_call.1} parent=47 // pred_region
          %s446 = sand.u32 %s161, 1
          %s447 = scalar_lea.sflag [#allocation3], %s446
          %s448 = sand.u32 %s161, 1
          %s449 = smul.addr %s448, 2
          %s450 = scalar_lea.vmem [#allocation2], %s449
          %451 = dma.done %s447, 32
        $region52: #{tpu_custom_call.1} parent=47 // pred_fallthru
          _
      $region48: #{tpu_custom_call.1} parent=5 // pred_fallthru
        _
    $region6: #{tpu_custom_call.1} parent=1 // loop_footer
      %s18 = sadd.s32 1, %s14
    $region7: #{tpu_custom_call.1} parent=1 // loop_footer_branch
      %13 = sbr.rel target = $region3
    $region8: #{tpu_custom_call.1} parent=1 // loop_exit
      _
    %452 = vsyncpa [#allocation3], 1
    %s453 = scalar_lea.sflag [#allocation3], 1
    %454 = vsyncpa %s453, 1

</llo_original>
